<compile_context>
chip_gen: v5e
topology: v5e:2x2
jax: 0.10.0
libtpu: 0.0.40
codegen_flags: <defaults>
</compile_context>

<pallas_src>
import functools

import jax
import jax.numpy as jnp
from jax import lax
from jax.experimental import pallas as pl
from jax.experimental.pallas import tpu as pltpu


def _attention_kernel(x_ref, w_ref, o_ref, m_sc, l_sc, acc_sc, *,
                      seq_len, seq_tile, need_mask):
    # x_ref: (TS, D) streamed tile, w_ref: (1, D) resident, o_ref: (1, D) resident,
    # scratch: m (1,1), l (1,1), acc (1,D), all f32.
    step = pl.program_id(0)

    @pl.when(step == 0)
    def _init():
        m_sc[...] = jnp.full_like(m_sc, -jnp.inf)
        l_sc[...] = jnp.zeros_like(l_sc)
        acc_sc[...] = jnp.zeros_like(acc_sc)

    x = x_ref[...]                                   # (TS, D), input dtype

    if need_mask:
        row = step * seq_tile + lax.broadcasted_iota(jnp.int32, (x.shape[0], 1), 0)
        valid = row < seq_len                        # (TS, 1)
        # Zero the out-of-range rows BEFORE any matmul: the ragged last block's
        # VMEM tail is uninitialized and 0 * NaN would poison the accumulator.
        x = jnp.where(valid, x, jnp.zeros_like(x))

    # fc(x) on the MXU with w kept lane-dense: (TS, D) x (1, D) -> (TS, 1) f32.
    # (Bias omitted: softmax over dim 0 is invariant to a scalar shift.)
    scores = lax.dot_general(
        x, w_ref[...],
        dimension_numbers=(((1,), (1,)), ((), ())),
        preferred_element_type=jnp.float32,
    )
    if need_mask:
        scores = jnp.where(valid, scores, -jnp.inf)  # exp() == 0 for padding rows

    # Online (flash-style) softmax update, state kept in f32.
    m_prev = m_sc[...]
    m_new = jnp.maximum(m_prev, jnp.max(scores, axis=0, keepdims=True))
    alpha = jnp.exp(m_prev - m_new)                  # (1, 1)
    p = jnp.exp(scores - m_new)                      # (TS, 1)
    l_sc[...] = alpha * l_sc[...] + jnp.sum(p, axis=0, keepdims=True)
    # Weighted-sum contraction on the MXU over the sequence dim: (TS,1)x(TS,D)->(1,D).
    acc_sc[...] = alpha * acc_sc[...] + lax.dot_general(
        p.astype(x.dtype), x,
        dimension_numbers=(((0,), (0,)), ((), ())),
        preferred_element_type=jnp.float32,
    )
    m_sc[...] = m_new

    @pl.when(step == pl.num_programs(0) - 1)
    def _finalize():
        # Exact divide: runs once on a single (1, D) slab, essentially free.
        o_ref[...] = (acc_sc[...] / l_sc[...]).astype(o_ref.dtype)


def _pick_seq_tile(seq_len, feat_dim, itemsize, target_tile_bytes=4 << 20):
    # Sublane multiple of the packed dtype: 8 (f32), 16 (bf16), 32 (int8).
    sublane = max(8, 32 // max(1, itemsize))
    row_bytes = max(1, feat_dim * itemsize)
    rows = (target_tile_bytes // row_bytes) // sublane * sublane
    rows = max(sublane, rows)
    # Bound the (TS, 1) softmax intermediates (1/128 lane utilization).
    rows = min(rows, 4096)
    # Never larger than the (sublane-rounded) sequence itself.
    rows = min(rows, pl.cdiv(seq_len, sublane) * sublane)
    return int(rows)


def attention_layer(x, w, b=None, *, seq_tile=None):
    """x: (S, D); w: (1, D) (nn.Linear.weight layout); b ignored (softmax-shift
    invariant).  Returns (D,) weighted sum, matching the PyTorch forward."""
    del b  # scalar bias is a no-op under softmax over dim 0
    S, D = x.shape
    itemsize = jnp.dtype(x.dtype).itemsize
    sublane = max(8, 32 // max(1, itemsize))
    if seq_tile is None:
        seq_tile = _pick_seq_tile(S, D, itemsize)
    else:
        seq_tile = max(sublane, (int(seq_tile) // sublane) * sublane)
    num_tiles = pl.cdiv(S, seq_tile)
    need_mask = (S % seq_tile) != 0                  # only the last tile is ragged

    w2d = jnp.reshape(w, (1, D)).astype(x.dtype)     # natural lane-dense layout

    # Explicit VMEM budget: 2 pipeline buffers for x + w + out + f32 scratch,
    # doubled for headroom, capped at 48 MiB (safe on v7x 64 MiB physical).
    tile_bytes = seq_tile * D * itemsize
    needed = 2 * tile_bytes + 4 * D * itemsize + 8 * D + (1 << 20)
    vmem_limit = int(min(max(2 * needed, 24 << 20), 48 << 20))

    out = pl.pallas_call(
        functools.partial(_attention_kernel, seq_len=S, seq_tile=seq_tile,
                          need_mask=need_mask),
        out_shape=jax.ShapeDtypeStruct((1, D), x.dtype),
        grid_spec=pltpu.PrefetchScalarGridSpec(
            num_scalar_prefetch=0,
            grid=(num_tiles,),
            in_specs=[
                pl.BlockSpec((seq_tile, D), lambda s: (s, 0)),   # x: streamed tiles
                pl.BlockSpec((1, D), lambda s: (0, 0)),          # w: resident, lane-dense
            ],
            out_specs=pl.BlockSpec((1, D), lambda s: (0, 0)),    # resident output
            scratch_shapes=[
                pltpu.VMEM((1, 1), jnp.float32),    # running max   m
                pltpu.VMEM((1, 1), jnp.float32),    # running denom l
                pltpu.VMEM((1, D), jnp.float32),    # f32 output accumulator
            ],
        ),
        compiler_params=pltpu.CompilerParams(
            dimension_semantics=("arbitrary",),      # sequence axis is a reduction
            vmem_limit_bytes=vmem_limit,
        ),
        cost_estimate=pl.CostEstimate(
            flops=4 * S * D,
            transcendentals=S + num_tiles,
            bytes_accessed=S * D * itemsize + 2 * D * itemsize,
        ),
    )(x, w2d)
    return out[0]


def attention_layer_ref(x, w, b):
    # Pure-JAX reference mirroring the PyTorch forward exactly (incl. bias).
    scores = x @ w.T + jnp.reshape(b, (1, 1))        # (S, 1)
    weights = jax.nn.softmax(scores, axis=0)         # softmax over dim=0
    return jnp.sum(weights * x, axis=0)              # (D,)


if __name__ == "__main__":
    key = jax.random.PRNGKey(0)
    k_x, k_w, k_b = jax.random.split(key, 3)

    # Small but representative: S is not a tile multiple (exercises the ragged
    # in-kernel mask), D is a multiple of 128 (lane-dense output).
    S, D = 20, 128
    x = jax.random.normal(k_x, (S, D), dtype=jnp.float32)

    # Deterministic "Linear(input_dim, 1)" parameters (synthetic init).
    bound = 1.0 / (D ** 0.5)
    w = jax.random.uniform(k_w, (1, D), dtype=jnp.float32, minval=-bound, maxval=bound)
    b = jax.random.uniform(k_b, (1, 1), dtype=jnp.float32, minval=-bound, maxval=bound)

    ref = attention_layer_ref(x, w, b)

    # 1) Forced small tile: 3 grid steps -> exercises the online-softmax carry
    #    and the ragged-last-tile mask (S=20 not a multiple of 8).
    out_small = attention_layer(x, w, b, seq_tile=8)
    jax.block_until_ready(out_small)
    assert out_small.shape == (D,)
    assert jnp.allclose(out_small, ref, atol=1e-4, rtol=1e-4), \
        float(jnp.max(jnp.abs(out_small - ref)))

    # 2) Auto (byte-sized) tile: single ragged block path.
    out_auto = attention_layer(x, w, b)
    jax.block_until_ready(out_auto)
    assert jnp.allclose(out_auto, ref, atol=1e-4, rtol=1e-4), \
        float(jnp.max(jnp.abs(out_auto - ref)))

    # 3) Tile-aligned sequence: exercises the mask-free specialization.
    x16 = x[:16]
    ref16 = attention_layer_ref(x16, w, b)
    out16 = attention_layer(x16, w, b, seq_tile=8)
    jax.block_until_ready(out16)
    assert jnp.allclose(out16, ref16, atol=1e-4, rtol=1e-4), \
        float(jnp.max(jnp.abs(out16 - ref16)))

    print("KERNEL_OK")
</pallas_src>

<mosaic_0001>
module attributes {stable_mosaic.version = 11 : i64} {
  func.func @_attention_kernel(%arg0: i32, %arg1: memref<8x128xf32, #tpu.memory_space<vmem>>, %arg2: memref<1x128xf32, #tpu.memory_space<vmem>>, %arg3: memref<1x128xf32, #tpu.memory_space<vmem>>, %arg4: memref<1x1xf32, #tpu.memory_space<vmem>>, %arg5: memref<1x1xf32, #tpu.memory_space<vmem>>, %arg6: memref<1x128xf32, #tpu.memory_space<vmem>>) attributes {dimension_semantics = [#tpu.dimension_semantics<arbitrary>], iteration_bounds = array<i64: 3>, scalar_prefetch = 0 : i64, scratch_operands = 3 : i64, tpu.core_type = #tpu.core_type<tc>, window_params = [{transform_indices = @transform_0, window_bounds = array<i64: 8, 128>}, {pipeline_mode = #tpu.pipeline_mode<synchronous>, transform_indices = @transform_1, window_bounds = array<i64: 1, 128>}, {pipeline_mode = #tpu.pipeline_mode<synchronous>, transform_indices = @transform_2, window_bounds = array<i64: 1, 128>}]} {
    %c0_i32 = arith.constant 0 : i32
    %0 = arith.cmpi eq, %arg0, %c0_i32 : i32
    %1 = arith.extui %0 : i1 to i32
    %c0_i32_0 = arith.constant 0 : i32
    %2 = arith.cmpi ne, %1, %c0_i32_0 : i32
    scf.if %2 {
      %cst_22 = arith.constant 0xFF800000 : f32
      %43 = vector.broadcast %cst_22 : f32 to vector<1x1xf32>
      %c0_23 = arith.constant 0 : index
      %c0_24 = arith.constant 0 : index
      %44 = vector.load %arg4[%c0_23, %c0_24] : memref<1x1xf32, #tpu.memory_space<vmem>>, vector<1x1xf32>
      tpu.vector_store %arg4[%c0_23, %c0_24], %43 {strides = array<i32>} : memref<1x1xf32, #tpu.memory_space<vmem>>, vector<1x1xf32>,
      %cst_25 = arith.constant 0.000000e+00 : f32
      %45 = vector.broadcast %cst_25 : f32 to vector<1x1xf32>
      %c0_26 = arith.constant 0 : index
      %c0_27 = arith.constant 0 : index
      %46 = vector.load %arg5[%c0_26, %c0_27] : memref<1x1xf32, #tpu.memory_space<vmem>>, vector<1x1xf32>
      tpu.vector_store %arg5[%c0_26, %c0_27], %45 {strides = array<i32>} : memref<1x1xf32, #tpu.memory_space<vmem>>, vector<1x1xf32>,
      %cst_28 = arith.constant 0.000000e+00 : f32
      %47 = vector.broadcast %cst_28 : f32 to vector<1x128xf32>
      %c0_29 = arith.constant 0 : index
      %c0_30 = arith.constant 0 : index
      %48 = vector.load %arg6[%c0_29, %c0_30] : memref<1x128xf32, #tpu.memory_space<vmem>>, vector<1x128xf32>
      tpu.vector_store %arg6[%c0_29, %c0_30], %47 {strides = array<i32>} : memref<1x128xf32, #tpu.memory_space<vmem>>, vector<1x128xf32>,
    } else {
    }
    %c0 = arith.constant 0 : index
    %c0_1 = arith.constant 0 : index
    %3 = vector.load %arg1[%c0, %c0_1] : memref<8x128xf32, #tpu.memory_space<vmem>>, vector<8x128xf32>
    %c8_i32 = arith.constant 8 : i32
    %4 = arith.muli %arg0, %c8_i32 : i32
    %5 = tpu.iota {dimensions = array<i32: 0>} : vector<8x1xi32>
    %6 = vector.broadcast %4 : i32 to vector<8x1xi32>
    %7 = arith.addi %6, %5 : vector<8x1xi32>
    %c20_i32 = arith.constant 20 : i32
    %8 = vector.broadcast %c20_i32 : i32 to vector<8x1xi32>
    %9 = arith.cmpi slt, %7, %8 : vector<8x1xi32>
    %cst = arith.constant 0.000000e+00 : f32
    %10 = vector.broadcast %cst : f32 to vector<8x128xf32>
    %11 = vector.shape_cast %9 : vector<8x1xi1> to vector<8x1xi1>
    %12 = vector.broadcast %11 : vector<8x1xi1> to vector<8x128xi1>
    %13 = arith.select %12, %3, %10 : vector<8x128xi1>, vector<8x128xf32>
    %c0_2 = arith.constant 0 : index
    %c0_3 = arith.constant 0 : index
    %14 = vector.load %arg2[%c0_2, %c0_3] : memref<1x128xf32, #tpu.memory_space<vmem>>, vector<1x128xf32>
    %cst_4 = arith.constant dense<0.000000e+00> : vector<8x1xf32>
    %15 = tpu.matmul %13, %14, %cst_4 {dimension_numbers = #tpu.dot_dimension_numbers<[1], [1], [0], [0], [0, 0, 1, 0], [], []>} : vector<8x128xf32>, vector<1x128xf32>, vector<8x1xf32> -> vector<8x1xf32>
    %cst_5 = arith.constant 0xFF800000 : f32
    %16 = vector.broadcast %cst_5 : f32 to vector<8x1xf32>
    %17 = arith.select %9, %15, %16 : vector<8x1xi1>, vector<8x1xf32>
    %c0_6 = arith.constant 0 : index
    %c0_7 = arith.constant 0 : index
    %18 = vector.load %arg4[%c0_6, %c0_7] : memref<1x1xf32, #tpu.memory_space<vmem>>, vector<1x1xf32>
    %cst_8 = arith.constant dense<0xFF800000> : vector<1xf32>
    %19 = vector.multi_reduction <maximumf>, %17, %cst_8 [0] : vector<8x1xf32> to vector<1xf32>
    %20 = vector.shape_cast %19 : vector<1xf32> to vector<1x1xf32>
    %21 = arith.maximumf %18, %20 : vector<1x1xf32>
    %22 = arith.subf %18, %21 : vector<1x1xf32>
    %23 = math.exp %22 : vector<1x1xf32>
    %24 = vector.broadcast %21 : vector<1x1xf32> to vector<8x1xf32>
    %25 = arith.subf %17, %24 : vector<8x1xf32>
    %26 = math.exp %25 : vector<8x1xf32>
    %c0_9 = arith.constant 0 : index
    %c0_10 = arith.constant 0 : index
    %27 = vector.load %arg5[%c0_9, %c0_10] : memref<1x1xf32, #tpu.memory_space<vmem>>, vector<1x1xf32>
    %28 = arith.mulf %23, %27 : vector<1x1xf32>
    %cst_11 = arith.constant dense<0.000000e+00> : vector<1xf32>
    %29 = vector.multi_reduction <add>, %26, %cst_11 [0] : vector<8x1xf32> to vector<1xf32>
    %30 = vector.shape_cast %29 : vector<1xf32> to vector<1x1xf32>
    %31 = arith.addf %28, %30 : vector<1x1xf32>
    %c0_12 = arith.constant 0 : index
    %c0_13 = arith.constant 0 : index
    %32 = vector.load %arg5[%c0_12, %c0_13] : memref<1x1xf32, #tpu.memory_space<vmem>>, vector<1x1xf32>
    tpu.vector_store %arg5[%c0_12, %c0_13], %31 {strides = array<i32>} : memref<1x1xf32, #tpu.memory_space<vmem>>, vector<1x1xf32>,
    %c0_14 = arith.constant 0 : index
    %c0_15 = arith.constant 0 : index
    %33 = vector.load %arg6[%c0_14, %c0_15] : memref<1x128xf32, #tpu.memory_space<vmem>>, vector<1x128xf32>
    %34 = vector.broadcast %23 : vector<1x1xf32> to vector<1x128xf32>
    %35 = arith.mulf %34, %33 : vector<1x128xf32>
    %cst_16 = arith.constant dense<0.000000e+00> : vector<1x128xf32>
    %36 = tpu.matmul %26, %13, %cst_16 {dimension_numbers = #tpu.dot_dimension_numbers<[0], [0], [1], [1], [0, 1, 1, 1], [], []>} : vector<8x1xf32>, vector<8x128xf32>, vector<1x128xf32> -> vector<1x128xf32>
    %37 = arith.addf %35, %36 : vector<1x128xf32>
    %c0_17 = arith.constant 0 : index
    %c0_18 = arith.constant 0 : index
    %38 = vector.load %arg6[%c0_17, %c0_18] : memref<1x128xf32, #tpu.memory_space<vmem>>, vector<1x128xf32>
    tpu.vector_store %arg6[%c0_17, %c0_18], %37 {strides = array<i32>} : memref<1x128xf32, #tpu.memory_space<vmem>>, vector<1x128xf32>,
    %c0_19 = arith.constant 0 : index
    %c0_20 = arith.constant 0 : index
    %39 = vector.load %arg4[%c0_19, %c0_20] : memref<1x1xf32, #tpu.memory_space<vmem>>, vector<1x1xf32>
    tpu.vector_store %arg4[%c0_19, %c0_20], %21 {strides = array<i32>} : memref<1x1xf32, #tpu.memory_space<vmem>>, vector<1x1xf32>,
    %c2_i32 = arith.constant 2 : i32
    %40 = arith.cmpi eq, %arg0, %c2_i32 : i32
    %41 = arith.extui %40 : i1 to i32
    %c0_i32_21 = arith.constant 0 : i32
    %42 = arith.cmpi ne, %41, %c0_i32_21 : i32
    scf.if %42 {
      %c0_22 = arith.constant 0 : index
      %c0_23 = arith.constant 0 : index
      %43 = vector.load %arg6[%c0_22, %c0_23] : memref<1x128xf32, #tpu.memory_space<vmem>>, vector<1x128xf32>
      %c0_24 = arith.constant 0 : index
      %c0_25 = arith.constant 0 : index
      %44 = vector.load %arg5[%c0_24, %c0_25] : memref<1x1xf32, #tpu.memory_space<vmem>>, vector<1x1xf32>
      %45 = vector.broadcast %44 : vector<1x1xf32> to vector<1x128xf32>
      %46 = arith.divf %43, %45 : vector<1x128xf32>
      %c0_26 = arith.constant 0 : index
      %c0_27 = arith.constant 0 : index
      %47 = vector.load %arg3[%c0_26, %c0_27] : memref<1x128xf32, #tpu.memory_space<vmem>>, vector<1x128xf32>
      tpu.vector_store %arg3[%c0_26, %c0_27], %46 {strides = array<i32>} : memref<1x128xf32, #tpu.memory_space<vmem>>, vector<1x128xf32>,
    } else {
    }
    return
  }
  func.func @transform_0(%arg0: i32) -> (i32, i32) {
    %c0_i32 = arith.constant 0 : i32
    %c0_i32_0 = arith.constant 0 : i32
    return %arg0, %c0_i32 : i32, i32
  }
  func.func @transform_1(%arg0: i32) -> (i32, i32) {
    %c0_i32 = arith.constant 0 : i32
    %c0_i32_0 = arith.constant 0 : i32
    %c0_i32_1 = arith.constant 0 : i32
    return %c0_i32, %c0_i32_0 : i32, i32
  }
  func.func @transform_2(%arg0: i32) -> (i32, i32) {
    %c0_i32 = arith.constant 0 : i32
    %c0_i32_0 = arith.constant 0 : i32
    %c0_i32_1 = arith.constant 0 : i32
    return %c0_i32, %c0_i32_0 : i32, i32
  }
}

</mosaic_0001>

<llo_original>
// kernel: tpu_custom_call.1
$region0: #{tpu_custom_call.1}
  #allocation0 [shape = 'u32[]', space=smem, size = 0x4, offset = 0x4, fixed_abs, tag = 'smem constant byte address 0x4 - core index']
  #allocation1 [shape = 'u32[72,128]{1,0:T(1,128)}', space=vmem, size = 0x9000, scoped, tag = 'internal scratch']
  #allocation2 [shape = 'f32[1,1]{1,0:T(1,128)}', space=vmem, size = 0x200, scoped, tag = 'scratch operand']
  #allocation3 [shape = 'f32[1,1]{1,0:T(1,128)}', space=vmem, size = 0x200, scoped, tag = 'scratch operand']
  #allocation4 [shape = 'f32[1,128]{1,0:T(1,128)}', space=vmem, size = 0x200, scoped, tag = 'scratch operand']
  %s0 = inlined_call_operand.hbm [shape: f32[20,128], index: 0, kind: input, shape index: {}]
  %s1 = inlined_call_operand.hbm [shape: f32[1,128], index: 1, kind: input, shape index: {}]
  %s2 = inlined_call_operand.hbm [shape: f32[1,128], index: 2, kind: output, shape index: {}]
  %s3 = sld [smem:[#allocation0]]
  $region57: #{tpu_custom_call.1} parent=0
    _
  %s5 = ssub.s32 1, %s3
  %s6 = scalar_select 0, %s5, %s3
  $region1: #{tpu_custom_call.1} parent=0
    #allocation5 [shape = 'u8[8192]{0}', space=vmem, size = 0x2000, scoped, tag = 'input window, operand 0']
    #allocation6 [shape = 's32[2]{0}', space=sflag, size = 0x8, scoped, tag = 'scoped memory for tpu_custom_call.1']
    #allocation7 [shape = 's32[2]{0}', space=sflag, size = 0x8, scoped, tag = 'scoped memory for tpu_custom_call.1']
    #allocation8 [shape = 'u8[512]{0}', space=vmem, size = 0x400, scoped, tag = 'input window, operand 1, single buffered']
    #allocation9 [shape = 's32[1]{0}', space=sflag, size = 0x4, scoped, tag = 'scoped memory for tpu_custom_call.1']
    #allocation10 [shape = 'u8[512]{0}', space=vmem, size = 0x400, scoped, tag = 'output window, operand 0, single buffered']
    %7 = vsyncpa [#allocation6], 0
    %s8 = scalar_lea.sflag [#allocation6], 1
    %9 = vsyncpa %s8, 0
    %10 = vsyncpa [#allocation9], 0
    %11 = vsyncpa [#allocation7], 0
    loop: start=0, step=1, limit=5
    $region2: #{tpu_custom_call.1} parent=1 // loop_pre_header
      _
    $region3: #{tpu_custom_call.1} parent=1 // loop_header
      %s13 = sphi 0, %s17
      %p14 = scmp.ge.s32.totalorder %s13, 5
      %s23 = sphi 0, %s25
      %s26 = sphi 0, %s23
      %s27 = sphi 0, %s26
      %s43 = sphi 0, %s27
      %s47 = sphi 0, %s47
      %s49 = sphi 0, %s47
      %s50 = sphi 0, %s49
      %s64 = sphi 0, %s50
      %s68 = sphi 0, %s68
      %s70 = sphi 0, %s68
      %s71 = sphi 0, %s70
      %s85 = sphi 0, %s71
    $region4: #{tpu_custom_call.1} parent=1 // loop_header_branch
      %16 = sbr.rel (%p14) target = $region8
    $region5: #{tpu_custom_call.1} parent=1 // loop_body
      %s18 = ssub.s32 %s13, 1
      %s19 = ssub.s32 %s13, 2
      %s20 = sadd.s32 %s13, 1
      %s21 = ssub.s32 %s13, %s20
      %p22 = scmp.eq.s32.totalorder %s21, 0
      %s24 = sadd.s32 %s23, 1
      %s25 = scalar_select %p22, %s23, %s24
      %p28 = pneg %p22
      %p29 = scmp.eq.s32.totalorder %s13, 2
      %p30 = por %p28, %p29
      %p31 = scmp.ne.s32.totalorder %s23, %s26
      %p32 = scmp.eq.s32.totalorder %s13, 0
      %p33 = por %p31, %p32
      %p34 = scmp.ne.s32.totalorder %s23, %s26
      %p35 = scmp.eq.s32.totalorder %s18, 2
      %p36 = por %p34, %p35
      %p37 = scmp.ne.s32.totalorder %s26, %s27
      %p38 = scmp.eq.s32.totalorder %s18, 0
      %p39 = por %p37, %p38
      %p40 = scmp.ne.s32.totalorder %s26, %s27
      %p41 = scmp.eq.s32.totalorder %s19, 2
      %p42 = por %p40, %p41
      %p44 = scmp.ne.s32.totalorder %s27, %s43
      %p45 = scmp.eq.s32.totalorder %s19, 0
      %p46 = por %p44, %p45
      %s48 = sadd.s32 %s47, 1
      %p51 = scmp.eq.s32.totalorder %s13, 2
      %p52 = scmp.ne.s32.totalorder %s47, %s49
      %p53 = scmp.eq.s32.totalorder %s13, 0
      %p54 = por %p52, %p53
      %p55 = scmp.ne.s32.totalorder %s47, %s49
      %p56 = scmp.eq.s32.totalorder %s18, 2
      %p57 = por %p55, %p56
      %p58 = scmp.ne.s32.totalorder %s49, %s50
      %p59 = scmp.eq.s32.totalorder %s18, 0
      %p60 = por %p58, %p59
      %p61 = scmp.ne.s32.totalorder %s49, %s50
      %p62 = scmp.eq.s32.totalorder %s19, 2
      %p63 = por %p61, %p62
      %p65 = scmp.ne.s32.totalorder %s50, %s64
      %p66 = scmp.eq.s32.totalorder %s19, 0
      %p67 = por %p65, %p66
      %s69 = sadd.s32 %s68, 1
      %p72 = scmp.eq.s32.totalorder %s13, 2
      %p73 = scmp.ne.s32.totalorder %s68, %s70
      %p74 = scmp.eq.s32.totalorder %s13, 0
      %p75 = por %p73, %p74
      %p76 = scmp.ne.s32.totalorder %s68, %s70
      %p77 = scmp.eq.s32.totalorder %s18, 2
      %p78 = por %p76, %p77
      %p79 = scmp.ne.s32.totalorder %s70, %s71
      %p80 = scmp.eq.s32.totalorder %s18, 0
      %p81 = por %p79, %p80
      %p82 = scmp.ne.s32.totalorder %s70, %s71
      %p83 = scmp.eq.s32.totalorder %s19, 2
      %p84 = por %p82, %p83
      %p86 = scmp.ne.s32.totalorder %s71, %s85
      %p87 = scmp.eq.s32.totalorder %s19, 0
      %p88 = por %p86, %p87
      %p89 = scmp.le.s32.totalorder 1, %s13
      %p90 = scmp.lt.s32.totalorder %s13, 4
      %p91 = pnand %p89, %p90
      %p92 = pneg %p91
      // Predicated region
      $region9: #{tpu_custom_call.1} parent=5 // pred_check
        _
      $region10: #{tpu_custom_call.1} parent=5 // pred_check_branch
        %94 = sbr.rel (%p91) target = $region12
      $region11: #{tpu_custom_call.1} parent=5 // pred_region
        %s95 = ssub.s32 %s13, 1
        // Predicated region
        $region13: #{tpu_custom_call.1} parent=11 // pred_check
          %p96 = pneg %p60
        $region14: #{tpu_custom_call.1} parent=11 // pred_check_branch
          %98 = sbr.rel (%p96) target = $region16
        $region15: #{tpu_custom_call.1} parent=11 // pred_region
          %100 = vsyncadd [#allocation9], 0
          %s102 = sshll.u32 %s1, 4
          %s103 = int_to_ptr.hbm [resolvable:$true] %s102
          %s104 = sshll.u32 [#allocation8], 4
          %s105 = int_to_ptr.vmem [resolvable:$true] %s104
          %107 = dma.hbm_to_vmem [thread:$0]  %s103, 16, %s105, [#allocation9]
        $region16: #{tpu_custom_call.1} parent=11 // pred_fallthru
          _
      $region12: #{tpu_custom_call.1} parent=5 // pred_fallthru
        _
      %p108 = scmp.lt.s32.totalorder %s13, 3
      // Predicated region
      $region17: #{tpu_custom_call.1} parent=5 // pred_check
        %p109 = pneg %p108
      $region18: #{tpu_custom_call.1} parent=5 // pred_check_branch
        %111 = sbr.rel (%p109) target = $region20
      $region19: #{tpu_custom_call.1} parent=5 // pred_region
        // Predicated region
        $region21: #{tpu_custom_call.1} parent=19 // pred_check
          %p112 = pneg %p33
        $region22: #{tpu_custom_call.1} parent=19 // pred_check_branch
          %114 = sbr.rel (%p112) target = $region24
        $region23: #{tpu_custom_call.1} parent=19 // pred_region
          %s115 = sand.u32 %s23, 1
          %s116 = scalar_lea.sflag [#allocation6], %s115
          %s117 = sand.u32 %s23, 1
          %s118 = smul.addr %s117, 8
          %s119 = scalar_lea.vmem [#allocation5], %s118
          %121 = vsyncadd %s116, 0
          %s122 = smul.addr %s13, 8
          %s123 = scalar_lea.hbm %s0, %s122
          %s125 = sshll.u32 %s123, 4
          %s126 = int_to_ptr.hbm [resolvable:$true] %s125
          %s127 = sshll.u32 %s119, 4
          %s128 = int_to_ptr.vmem [resolvable:$true] %s127
          %130 = dma.hbm_to_vmem [thread:$0]  %s126, 128, %s128, %s116
        $region24: #{tpu_custom_call.1} parent=19 // pred_fallthru
          _
      $region20: #{tpu_custom_call.1} parent=5 // pred_fallthru
        _
      %p131 = scmp.le.s32.totalorder 1, %s13
      %p132 = scmp.lt.s32.totalorder %s13, 4
      %p133 = pnand %p131, %p132
      %p134 = pneg %p133
      // Predicated region
      $region25: #{tpu_custom_call.1} parent=5 // pred_check
        _
      $region26: #{tpu_custom_call.1} parent=5 // pred_check_branch
        %136 = sbr.rel (%p133) target = $region28
      $region27: #{tpu_custom_call.1} parent=5 // pred_region
        %s137 = ssub.s32 %s13, 1
        %s138 = sand.u32 %s26, 1
        %s139 = scalar_lea.sflag [#allocation6], %s138
        %s140 = sand.u32 %s26, 1
        %s141 = smul.addr %s140, 8
        %s142 = scalar_lea.vmem [#allocation5], %s141
        // Predicated region
        $region29: #{tpu_custom_call.1} parent=27 // pred_check
          %p143 = pneg %p39
        $region30: #{tpu_custom_call.1} parent=27 // pred_check_branch
          %145 = sbr.rel (%p143) target = $region32
        $region31: #{tpu_custom_call.1} parent=27 // pred_region
          %147 = dma.done %s139, 128
        $region32: #{tpu_custom_call.1} parent=27 // pred_fallthru
          _
        // Predicated region
        $region33: #{tpu_custom_call.1} parent=27 // pred_check
          %p148 = pneg %p60
        $region34: #{tpu_custom_call.1} parent=27 // pred_check_branch
          %150 = sbr.rel (%p148) target = $region36
        $region35: #{tpu_custom_call.1} parent=27 // pred_region
          %152 = dma.done [#allocation9], 16
        $region36: #{tpu_custom_call.1} parent=27 // pred_fallthru
          _
        %s153 = sand.u32 %s26, 1
        %s154 = scalar_lea.sflag [#allocation6], %s153
        %s155 = sand.u32 %s26, 1
        %s156 = smul.addr %s155, 8
        %s157 = scalar_lea.vmem [#allocation5], %s156
        %p158 = pneg %p39
        %p159 = pneg %p36
        %p160 = pneg %p60
        %p161 = pneg %p57
        %p162 = pneg %p81
        %p163 = pneg %p78
        %p164 = scmp.eq.s32.totalorder %s18, 0
        // Predicated region
        $region37: #{tpu_custom_call.1} parent=27 // pred_check
          %p165 = pneg %p164
        $region38: #{tpu_custom_call.1} parent=27 // pred_check_branch
          %167 = sbr.rel (%p165) target = $region40
        $region39: #{tpu_custom_call.1} parent=27 // pred_region
          %vm168 = vcmask 0
          %169 = vst.msk [vmem:[#allocation2] sm:$0x1] %vm168, -inf
          %170 = vst.msk [vmem:[#allocation3] sm:$0x1] %vm168, 0.0
          %171 = vst [vmem:[#allocation4] sm:$0x1] 0.0
        $region40: #{tpu_custom_call.1} parent=27 // pred_fallthru
          _
        %v172 = vld [vmem:[%s142] sm:$0xff]
        %s173 = smul.u32 %s18, 8
        %v174 = vlaneseq
        %v175 = vshrl.u32 %v174, 7
        %v176 = vstv %s173
        %v177 = vadd.s32 %v176, %v175
        %vm178 = vcmp.lt.s32.totalorder %v177, 20
        %v179 = vsel %vm178, 1, 0
        %vm180 = vcmp.eq.s32.totalorder %v179, 1
        %v181 = vsel %vm180, %v172, 0.0
        %v182 = vld [vmem:[#allocation8] sm:$0x1]
        %v184 = vperm.slane %v182, 0
        %v186 = vmul.f32 %v181, %v184
        %187 = vadd.xlane.f32.xlu0 %v186
        %v188 = vpop.xlane.xlu0 %187
        %v189 = vsel %vm178, %v188, -inf
        %v190 = vld [vmem:[#allocation2] sm:$0x1]
        %v191 = vrot.slane %v189, 4
        %v192 = vmax.f32 %v189, %v191
        %v193 = vrot.slane %v192, 2
        %v194 = vmax.f32 %v192, %v193
        %v195 = vrot.slane %v194, 1
        %v196 = vmax.f32 %v194, %v195
        %v197 = vmax.f32 %v190, %v196
        %v198 = vsub.f32 %v190, %v197
        %v199 = vmul.f32 %v198, 1.442695
        %v200 = vpow.pop %v199
        %v202 = vperm.slane %v197, 0
        %v204 = vsub.f32 %v189, %v202
        %v205 = vmul.f32 %v204, 1.442695
        %v206 = vpow.pop %v205
        %v207 = vld [vmem:[#allocation3] sm:$0x1]
        %v208 = vmul.f32 %v200, %v207
        %vm209 = vcmask 7168
        %v210 = vsel %vm209, %v206, 0.0
        %v211 = vrot.slane %v210, 4
        %v212 = vadd.f32 %v210, %v211
        %v213 = vrot.slane %v212, 2
        %v214 = vadd.f32 %v212, %v213
        %v215 = vrot.slane %v214, 1
        %v216 = vadd.f32 %v214, %v215
        %v217 = vadd.f32 %v208, %v216
        %vm218 = vcmask 0
        %219 = vst.msk [vmem:[#allocation3] sm:$0x1] %vm218, %v217
        %v220 = vld [vmem:[#allocation4] sm:$0x1]
        %222 = vset.pattern.permute.xlu0 0
        %223 = vperm.xlu0 %222, %v200
        %v224 = vpop.permute.xlu0 %223
        %v226 = vperm.slane %v224, 0
        %v227 = vmul.f32 %v226, %v220
        %228 = vxpose.xlu0.b32.start [1/16] %v206, 128
        %229 = vxpose.xlu0.b32.cont [2/16] 0.0, 128
        %230 = vxpose.xlu0.b32.cont [3/16] 0.0, 128
        %231 = vxpose.xlu0.b32.cont [4/16] 0.0, 128
        %232 = vxpose.xlu0.b32.cont [5/16] 0.0, 128
        %233 = vxpose.xlu0.b32.cont [6/16] 0.0, 128
        %234 = vxpose.xlu0.b32.cont [7/16] 0.0, 128
        %235 = vxpose.xlu0.b32.cont [8/16] 0.0, 128
        %236 = vxpose.xlu0.b32.cont [9/16] 0.0, 128
        %237 = vxpose.xlu0.b32.cont [10/16] 0.0, 128
        %238 = vxpose.xlu0.b32.cont [11/16] 0.0, 128
        %239 = vxpose.xlu0.b32.cont [12/16] 0.0, 128
        %240 = vxpose.xlu0.b32.cont [13/16] 0.0, 128
        %241 = vxpose.xlu0.b32.cont [14/16] 0.0, 128
        %242 = vxpose.xlu0.b32.cont [15/16] 0.0, 128
        %243 = vxpose.xlu0.b32.end [16/16] 0.0, 128
        %v244 = vpop.trf.xlu0
        %v245 = vpop.trf.xlu0
        %v246 = vpop.trf.xlu0
        %v247 = vpop.trf.xlu0
        %v248 = vpop.trf.xlu0
        %v249 = vpop.trf.xlu0
        %v250 = vpop.trf.xlu0
        %v251 = vpop.trf.xlu0
        %v252 = vpop.trf.xlu0
        %v253 = vpop.trf.xlu0
        %v254 = vpop.trf.xlu0
        %v255 = vpop.trf.xlu0
        %v256 = vpop.trf.xlu0
        %v257 = vpop.trf.xlu0
        %v258 = vpop.trf.xlu0
        %v259 = vpop.trf.xlu0
        %vm260 = vcmask 64512
        %v262 = vsel %vm260, %v244, 0
        %264 = vmatpush.msra.mxu0 0.0
        %265 = vmatpush.msra.mxu0 0.0
        %266 = vmatpush.msra.mxu0 0.0
        %267 = vmatpush.msra.mxu0 0.0
        %268 = vmatpush.msra.mxu0 0.0
        %269 = vmatpush.msra.mxu0 0.0
        %270 = vmatpush.msra.mxu0 0.0
        %271 = vmatpush.msra.mxu0 0.0
        %272 = vmatpush.msra.mxu0 0.0
        %273 = vmatpush.msra.mxu0 0.0
        %274 = vmatpush.msra.mxu0 0.0
        %275 = vmatpush.msra.mxu0 0.0
        %276 = vmatpush.msra.mxu0 0.0
        %277 = vmatpush.msra.mxu0 0.0
        %278 = vmatpush.msra.mxu0 0.0
        %279 = vmatpush.msra.mxu0 %v181
        %280 = vmatmul.f32.gmra.mxu0 %v262
        %v281 = vpop.f32.mrf.mxu0
        %v282 = vadd.f32 0.0, %v281
        %283 = vdwg.mxu0
        %v284 = vadd.f32 %v227, %v282
        %285 = vst [vmem:[#allocation4] sm:$0x1] %v284
        %286 = vst.msk [vmem:[#allocation2] sm:$0x1] %vm218, %v197
        %p287 = scmp.eq.s32.totalorder %s18, 2
        // Predicated region
        $region41: #{tpu_custom_call.1} parent=27 // pred_check
          %p288 = pneg %p287
        $region42: #{tpu_custom_call.1} parent=27 // pred_check_branch
          %290 = sbr.rel (%p288) target = $region44
        $region43: #{tpu_custom_call.1} parent=27 // pred_region
          %v291 = vld [vmem:[#allocation4] sm:$0x1]
          %v292 = vld [vmem:[#allocation3] sm:$0x1]
          %294 = vset.pattern.permute.xlu0 0
          %295 = vperm.xlu0 %294, %v292
          %v296 = vpop.permute.xlu0 %295
          %v298 = vperm.slane %v296, 0
          %v299 = vrcp.pop %v298
          %v300 = vmul.f32 %v298, %v299
          %v301 = vsub.f32 1.0, %v300
          %v302 = vmul.f32 %v299, %v301
          %v303 = vadd.f32 %v299, %v302
          %vm304 = vweird.f32 %v298
          %vm305 = vweird.f32 %v299
          %vm306 = vmor %vm304, %vm305
          %v307 = vsel %vm306, %v299, %v303
          %v308 = vand.u32 2147483647, %v298
          %vm309 = vcmp.eq.f32.partialorder %v308, 8.507059e+37
          %v310 = vand.u32 %v298, 2147483648
          %v311 = vor.u32 1.1754944e-38, %v310
          %v312 = vsel %vm309, %v311, %v307
          %v313 = vmul.f32 %v291, %v312
          %314 = vst [vmem:[#allocation10] sm:$0x1] %v313
        $region44: #{tpu_custom_call.1} parent=27 // pred_fallthru
          _
        // Predicated region
        $region45: #{tpu_custom_call.1} parent=27 // pred_check
          %p315 = pneg %p78
        $region46: #{tpu_custom_call.1} parent=27 // pred_check_branch
          %317 = sbr.rel (%p315) target = $region48
        $region47: #{tpu_custom_call.1} parent=27 // pred_region
          %319 = vsyncadd [#allocation7], 0
          %s321 = sshll.u32 [#allocation10], 4
          %s322 = int_to_ptr.vmem [resolvable:$true] %s321
          %s323 = sshll.u32 %s2, 4
          %s324 = int_to_ptr.hbm [resolvable:$true] %s323
          %326 = dma.vmem_to_hbm [thread:$0]  %s322, 16, %s324, [#allocation7]
        $region48: #{tpu_custom_call.1} parent=27 // pred_fallthru
          _
        // Predicated region
        $region49: #{tpu_custom_call.1} parent=27 // pred_check
          %p327 = pneg %p78
        $region50: #{tpu_custom_call.1} parent=27 // pred_check_branch
          %329 = sbr.rel (%p327) target = $region52
        $region51: #{tpu_custom_call.1} parent=27 // pred_region
          %331 = dma.done [#allocation7], 16
        $region52: #{tpu_custom_call.1} parent=27 // pred_fallthru
          _
      $region28: #{tpu_custom_call.1} parent=5 // pred_fallthru
        _
      %p332 = scmp.le.s32.totalorder 2, %s13
      // Predicated region
      $region53: #{tpu_custom_call.1} parent=5 // pred_check
        %p333 = pneg %p332
      $region54: #{tpu_custom_call.1} parent=5 // pred_check_branch
        %335 = sbr.rel (%p333) target = $region56
      $region55: #{tpu_custom_call.1} parent=5 // pred_region
        %s336 = ssub.s32 %s13, 2
      $region56: #{tpu_custom_call.1} parent=5 // pred_fallthru
        _
    $region6: #{tpu_custom_call.1} parent=1 // loop_footer
      %s17 = sadd.s32 1, %s13
    $region7: #{tpu_custom_call.1} parent=1 // loop_footer_branch
      %12 = sbr.rel target = $region3
    $region8: #{tpu_custom_call.1} parent=1 // loop_exit
      _
    %337 = vsyncpa [#allocation6], 1
    %s338 = scalar_lea.sflag [#allocation6], 1
    %339 = vsyncpa %s338, 1
    %340 = vsyncpa [#allocation9], 1
    %341 = vsyncpa [#allocation7], 1
    %s342 = scalar_lea.sflag [#allocation7], 1
    %343 = vsyncpa %s342, 1

</llo_original>
